<compile_context>
chip_gen: v6e
topology: v6e:2x2x1
jax: 0.10.0
libtpu: 0.0.40
codegen_flags: <defaults>
</compile_context>

<pallas_src>
from functools import partial

import jax
import jax.numpy as jnp
import numpy as np
from jax import lax
from jax.experimental import pallas as pl
from jax.experimental.pallas import tpu as pltpu


def _flash_mha_kernel(q_ref, k_ref, v_ref, bias_ref, out_ref,
                      m_scr, l_scr, acc_scr, *, exp_dtype):
    """Head-batched flash-attention core.

    Per grid step (b, iq, ik):
      q_ref    : (1, H, BQ, Dk)  compute dtype, already scaled by d_model**-0.5
      k_ref    : (1, H, BK, Dk)  compute dtype
      v_ref    : (1, H, BK, Dv)  compute dtype
      bias_ref : (1, H, BQ, BK)  compute dtype
      out_ref  : (1, H, BQ, Dv)
      m_scr/l_scr : (H, BQ, 1)  f32 running max / denom
      acc_scr     : (H, BQ, Dv) f32 running weighted sum of V
    """
    ik = pl.program_id(2)
    nk = pl.num_programs(2)

    @pl.when(ik == 0)
    def _init():
        m_scr[...] = jnp.full(m_scr.shape, -jnp.inf, dtype=jnp.float32)
        l_scr[...] = jnp.zeros(l_scr.shape, dtype=jnp.float32)
        acc_scr[...] = jnp.zeros(acc_scr.shape, dtype=jnp.float32)

    q = q_ref[0]                 # (H, BQ, Dk)
    k = k_ref[0]                 # (H, BK, Dk)
    v = v_ref[0]                 # (H, BK, Dv)

    qk_dims = (((2,), (2,)), ((0,), (0,)))   # contract Dk, batch over H (no k.T)
    pv_dims = (((2,), (1,)), ((0,), (0,)))   # contract BK, batch over H

    s = lax.dot_general(q, k, qk_dims, preferred_element_type=jnp.float32)
    s = s + bias_ref[0].astype(jnp.float32)                       # (H, BQ, BK)

    # Online (flash) softmax update over the Lk tiles.
    m_prev = m_scr[...]
    m_next = jnp.maximum(m_prev, jnp.max(s, axis=-1, keepdims=True))
    # Guard fully-masked rows (all-(-inf) bias): keep exp arguments finite.
    m_safe = jnp.where(m_next == -jnp.inf, jnp.zeros_like(m_next), m_next)
    alpha = jnp.exp(m_prev - m_safe)                               # (H, BQ, 1)
    p = jnp.exp((s - m_safe).astype(exp_dtype))                    # (H, BQ, BK)
    l_scr[...] = alpha * l_scr[...] + jnp.sum(p.astype(jnp.float32),
                                              axis=-1, keepdims=True)
    acc_scr[...] = alpha * acc_scr[...] + lax.dot_general(
        p.astype(v.dtype), v, pv_dims, preferred_element_type=jnp.float32)
    m_scr[...] = m_next

    @pl.when(ik == nk - 1)
    def _finalize():
        l = l_scr[...]
        # Fully-masked rows keep l == 0 -> output 0 instead of NaN/inf.
        l_safe = jnp.where(l > 0.0, l, jnp.ones_like(l))
        out_ref[0] = (acc_scr[...] * pl.reciprocal(l_safe, approx=True)
                      ).astype(out_ref.dtype)


def _round_up(x, m):
    return ((x + m - 1) // m) * m


def _device_kind():
    try:
        return jax.devices()[0].device_kind.lower()
    except Exception:
        return ""


def _default_tiles():
    kind = _device_kind()
    if "v7" in kind:
        return 128, 256        # 64 MiB VMEM: keep (H,bq,bk) intermediates small
    if "v5" in kind or "v6" in kind:
        return 256, 512        # 128 MiB VMEM: bigger tiles amortize overhead
    return 128, 256            # conservative default for unknown chips


def _default_exp_dtype():
    kind = _device_kind()
    if "v6" in kind or "v7" in kind:
        return jnp.bfloat16    # EUP bf16 path (exp is the secondary bottleneck)
    return jnp.float32         # v5e / older: no bf16 VPU/EUP path


def _nbytes(shape, dtype):
    return int(np.prod(shape)) * jnp.dtype(dtype).itemsize


def multi_head_attention(queries, keys, values, attn_bias, params, *,
                         n_head, d_key, d_value, d_model,
                         block_q=None, block_k=None,
                         compute_dtype=jnp.bfloat16):
    """Forward pass of the ucr MultiHeadAttention module.

    queries/keys/values: [B, L, d_model]; attn_bias: [B, n_head, Lq, Lk] or None.
    params = (wq, wk, wv, wp) stored as [in_features, out_features] matrices.
    """
    # TODO(synk): the PyTorch module's incremental-decoding `cache` path
    # (static_k/static_v and k/v concatenation) is not implemented here.
    # dropout_rate path is a no-op (F.dropout is called with training=False).
    if keys is None:
        keys = queries
    if values is None:
        values = keys

    B, Lq, Dm = queries.shape
    Lk = keys.shape[1]
    wq, wk, wv, wp = params

    scale = float(d_model) ** -0.5          # matches the torch module exactly

    # ---- Projections hoisted out of the kernel: single full-width matmuls,
    # softmax scale folded into wq, weights/activations pre-cast to bf16. ----
    wq3 = (wq * scale).reshape(Dm, n_head, d_key).astype(compute_dtype)
    wk3 = wk.reshape(Dm, n_head, d_key).astype(compute_dtype)
    wv3 = wv.reshape(Dm, n_head, d_value).astype(compute_dtype)
    wp3 = wp.reshape(n_head, d_value, Dm).astype(compute_dtype)

    q = jnp.einsum("bld,dhk->bhlk", queries.astype(compute_dtype), wq3,
                   preferred_element_type=jnp.float32).astype(compute_dtype)
    k = jnp.einsum("bld,dhk->bhlk", keys.astype(compute_dtype), wk3,
                   preferred_element_type=jnp.float32).astype(compute_dtype)
    v = jnp.einsum("bld,dhk->bhlk", values.astype(compute_dtype), wv3,
                   preferred_element_type=jnp.float32).astype(compute_dtype)

    if attn_bias is None:
        bias = jnp.zeros((B, n_head, Lq, Lk), jnp.float32)
    else:
        bias = jnp.broadcast_to(attn_bias, (B, n_head, Lq, Lk)).astype(jnp.float32)

    # ---- Tile selection + padding (no "whole sequence as one tile" fallback). ----
    dbq, dbk = _default_tiles()
    bq = block_q if block_q is not None else (
        _round_up(Lq, 8) if Lq <= dbq else dbq)
    bk = block_k if block_k is not None else (
        _round_up(Lk, 8) if Lk <= dbk else dbk)
    Lq_p = _round_up(Lq, bq)
    Lk_p = _round_up(Lk, bk)
    if Lq_p != Lq:
        q = jnp.pad(q, ((0, 0), (0, 0), (0, Lq_p - Lq), (0, 0)))
        bias = jnp.pad(bias, ((0, 0), (0, 0), (0, Lq_p - Lq), (0, 0)))
    if Lk_p != Lk:
        k = jnp.pad(k, ((0, 0), (0, 0), (0, Lk_p - Lk), (0, 0)))
        v = jnp.pad(v, ((0, 0), (0, 0), (0, Lk_p - Lk), (0, 0)))
        bias = jnp.pad(bias, ((0, 0), (0, 0), (0, 0), (0, Lk_p - Lk)),
                       constant_values=-jnp.inf)   # mask padded key positions
    bias = bias.astype(compute_dtype)
    n_q = Lq_p // bq
    n_k = Lk_p // bk

    # ---- Generation-aware VMEM budget from actual byte math (blocks are
    # double-buffered; include in-kernel s/p intermediates). ----
    block_bytes = 2 * (
        _nbytes((1, n_head, bq, d_key), compute_dtype)
        + _nbytes((1, n_head, bk, d_key), compute_dtype)
        + _nbytes((1, n_head, bk, d_value), compute_dtype)
        + _nbytes((1, n_head, bq, bk), compute_dtype)
        + _nbytes((1, n_head, bq, d_value), compute_dtype))
    scratch_bytes = (
        2 * _nbytes((n_head, bq, 128), jnp.float32)               # m, l (lane-padded)
        + _nbytes((n_head, bq, max(d_value, 128)), jnp.float32))  # PV accumulator
    inter_bytes = (
        2 * _nbytes((n_head, bq, bk), jnp.float32)                # s, exp argument
        + 2 * _nbytes((n_head, bq, bk), compute_dtype))           # p (+ cast for PV)
    try:
        info = pltpu.get_tpu_info()
        vmem_cap = int(getattr(info, "vmem_capacity_bytes", 64 * 2**20))
    except Exception:
        vmem_cap = 64 * 2**20
    needed = block_bytes + scratch_bytes + inter_bytes + (4 << 20)
    vmem_limit = int(min(max(vmem_cap - (2 << 20), 32 << 20),
                         max(32 << 20, needed)))

    kernel = partial(_flash_mha_kernel, exp_dtype=_default_exp_dtype())

    ctx = pl.pallas_call(
        kernel,
        out_shape=jax.ShapeDtypeStruct((B, n_head, Lq_p, d_value), compute_dtype),
        grid_spec=pltpu.PrefetchScalarGridSpec(
            num_scalar_prefetch=0,
            grid=(B, n_q, n_k),
            in_specs=[
                pl.BlockSpec((1, n_head, bq, d_key),
                             lambda b, iq, ik: (b, 0, iq, 0)),
                pl.BlockSpec((1, n_head, bk, d_key),
                             lambda b, iq, ik: (b, 0, ik, 0)),
                pl.BlockSpec((1, n_head, bk, d_value),
                             lambda b, iq, ik: (b, 0, ik, 0)),
                pl.BlockSpec((1, n_head, bq, bk),
                             lambda b, iq, ik: (b, 0, iq, ik)),
            ],
            out_specs=pl.BlockSpec((1, n_head, bq, d_value),
                                   lambda b, iq, ik: (b, 0, iq, 0)),
            scratch_shapes=[
                pltpu.VMEM((n_head, bq, 1), jnp.float32),         # running max
                pltpu.VMEM((n_head, bq, 1), jnp.float32),         # running denom
                pltpu.VMEM((n_head, bq, d_value), jnp.float32),   # running PV acc
            ],
        ),
        compiler_params=pltpu.CompilerParams(
            # TODO(synk): on v7x, evaluate pltpu.CORE_PARALLEL on the batch axis
            # and verify both TensorCores are loaded.
            dimension_semantics=("parallel", "parallel", "arbitrary"),
            vmem_limit_bytes=vmem_limit),
    )(q, k, v, bias)

    # ---- Output projection hoisted: one matmul contracting H*Dv
    # (the head "concat" + reduction comes for free inside the contraction). ----
    ctx = ctx[:, :, :Lq, :]
    out = jnp.einsum("bhqd,hdm->bqm", ctx, wp3,
                     preferred_element_type=jnp.float32)
    return out.astype(queries.dtype)


def _reference(queries, keys, values, attn_bias, params,
               *, n_head, d_key, d_value, d_model):
    """Pure-JAX (f32) reference mirroring the PyTorch forward exactly."""
    wq, wk, wv, wp = params
    B = queries.shape[0]
    q = (queries @ wq).reshape(B, -1, n_head, d_key).transpose(0, 2, 1, 3)
    k = (keys @ wk).reshape(B, -1, n_head, d_key).transpose(0, 2, 1, 3)
    v = (values @ wv).reshape(B, -1, n_head, d_value).transpose(0, 2, 1, 3)
    product = jnp.einsum("bhqd,bhkd->bhqk", q, k) * (d_model ** -0.5)
    product = product + attn_bias
    weights = jax.nn.softmax(product, axis=-1)
    out = jnp.einsum("bhqk,bhkd->bhqd", weights, v)
    out = out.transpose(0, 2, 1, 3).reshape(B, -1, n_head * d_value)
    return out @ wp


if __name__ == "__main__":
    # Module hyperparameters (small, TPU-friendly).
    d_model, d_key, d_value, n_head = 32, 16, 16, 2
    B, Lq, Lk = 2, 8, 8
    # dropout_rate = 0.0 -> dropout is a no-op (F.dropout called with training=False)

    key = jax.random.PRNGKey(0)
    k0, k1, k2, k3, k4, k5, k6 = jax.random.split(key, 7)

    # nn.Linear weight is [out, in]; we store the transposed [in, out] matrices.
    def init_w(k, fan_in, fan_out):
        bound = 1.0 / np.sqrt(fan_in)
        return jax.random.uniform(k, (fan_in, fan_out), jnp.float32, -bound, bound)

    wq = init_w(k0, d_model, d_key * n_head)
    wk = init_w(k1, d_model, d_key * n_head)
    wv = init_w(k2, d_model, d_value * n_head)
    wp = init_w(k3, d_value * n_head, d_model)
    params = (wq, wk, wv, wp)

    queries = jax.random.normal(k4, (B, Lq, d_model), jnp.float32)
    keys_in = jax.random.normal(k5, (B, Lk, d_model), jnp.float32)
    values_in = keys_in  # matches `values = keys if values is None else values`
    attn_bias = jax.random.normal(k6, (B, n_head, Lq, Lk), jnp.float32) * 0.1

    out = multi_head_attention(queries, keys_in, values_in, attn_bias, params,
                               n_head=n_head, d_key=d_key, d_value=d_value,
                               d_model=d_model)
    out = jax.block_until_ready(out)

    ref = _reference(queries, keys_in, values_in, attn_bias, params,
                     n_head=n_head, d_key=d_key, d_value=d_value,
                     d_model=d_model)
    # bf16 MXU operands + approximate EUP reciprocal -> compare at 2e-2.
    np.testing.assert_allclose(np.asarray(out), np.asarray(ref),
                               rtol=2e-2, atol=2e-2)

    print("KERNEL_OK")
</pallas_src>

<mosaic_0001>
module attributes {stable_mosaic.version = 11 : i64} {
  func.func @_flash_mha_kernel(%arg0: i32, %arg1: i32, %arg2: i32, %arg3: memref<1x2x8x16xbf16, #tpu.memory_space<vmem>>, %arg4: memref<1x2x8x16xbf16, #tpu.memory_space<vmem>>, %arg5: memref<1x2x8x16xbf16, #tpu.memory_space<vmem>>, %arg6: memref<1x2x8x8xbf16, #tpu.memory_space<vmem>>, %arg7: memref<1x2x8x16xbf16, #tpu.memory_space<vmem>>, %arg8: memref<2x8x1xf32, #tpu.memory_space<vmem>>, %arg9: memref<2x8x1xf32, #tpu.memory_space<vmem>>, %arg10: memref<2x8x16xf32, #tpu.memory_space<vmem>>) attributes {dimension_semantics = [#tpu.dimension_semantics<parallel>, #tpu.dimension_semantics<parallel>, #tpu.dimension_semantics<arbitrary>], iteration_bounds = array<i64: 2, 1, 1>, scalar_prefetch = 0 : i64, scratch_operands = 3 : i64, tpu.core_type = #tpu.core_type<tc>, window_params = [{transform_indices = @transform_0, window_bounds = array<i64: 1, 2, 8, 16>}, {transform_indices = @transform_1, window_bounds = array<i64: 1, 2, 8, 16>}, {transform_indices = @transform_2, window_bounds = array<i64: 1, 2, 8, 16>}, {transform_indices = @transform_3, window_bounds = array<i64: 1, 2, 8, 8>}, {transform_indices = @transform_4, window_bounds = array<i64: 1, 2, 8, 16>}]} {
    %c0_i32 = arith.constant 0 : i32
    %0 = arith.cmpi eq, %arg2, %c0_i32 : i32
    %1 = arith.extui %0 : i1 to i32
    %c0_i32_0 = arith.constant 0 : i32
    %2 = arith.cmpi ne, %1, %c0_i32_0 : i32
    scf.if %2 {
      %cst_41 = arith.constant 0xFF800000 : f32
      %44 = vector.broadcast %cst_41 : f32 to vector<2x8x1xf32>
      %c0_42 = arith.constant 0 : index
      %c0_43 = arith.constant 0 : index
      %c0_44 = arith.constant 0 : index
      %45 = vector.load %arg8[%c0_42, %c0_43, %c0_44] : memref<2x8x1xf32, #tpu.memory_space<vmem>>, vector<2x8x1xf32>
      tpu.vector_store %arg8[%c0_42, %c0_43, %c0_44], %44 {strides = array<i32>} : memref<2x8x1xf32, #tpu.memory_space<vmem>>, vector<2x8x1xf32>,
      %cst_45 = arith.constant 0.000000e+00 : f32
      %46 = vector.broadcast %cst_45 : f32 to vector<2x8x1xf32>
      %c0_46 = arith.constant 0 : index
      %c0_47 = arith.constant 0 : index
      %c0_48 = arith.constant 0 : index
      %47 = vector.load %arg9[%c0_46, %c0_47, %c0_48] : memref<2x8x1xf32, #tpu.memory_space<vmem>>, vector<2x8x1xf32>
      tpu.vector_store %arg9[%c0_46, %c0_47, %c0_48], %46 {strides = array<i32>} : memref<2x8x1xf32, #tpu.memory_space<vmem>>, vector<2x8x1xf32>,
      %cst_49 = arith.constant 0.000000e+00 : f32
      %48 = vector.broadcast %cst_49 : f32 to vector<2x8x16xf32>
      %c0_50 = arith.constant 0 : index
      %c0_51 = arith.constant 0 : index
      %c0_52 = arith.constant 0 : index
      %49 = vector.load %arg10[%c0_50, %c0_51, %c0_52] : memref<2x8x16xf32, #tpu.memory_space<vmem>>, vector<2x8x16xf32>
      tpu.vector_store %arg10[%c0_50, %c0_51, %c0_52], %48 {strides = array<i32>} : memref<2x8x16xf32, #tpu.memory_space<vmem>>, vector<2x8x16xf32>,
    } else {
    }
    %c0 = arith.constant 0 : index
    %c0_1 = arith.constant 0 : index
    %c0_2 = arith.constant 0 : index
    %c0_3 = arith.constant 0 : index
    %3 = vector.load %arg3[%c0, %c0_1, %c0_2, %c0_3] : memref<1x2x8x16xbf16, #tpu.memory_space<vmem>>, vector<1x2x8x16xbf16>
    %4 = vector.shape_cast %3 : vector<1x2x8x16xbf16> to vector<2x8x16xbf16>
    %c0_4 = arith.constant 0 : index
    %c0_5 = arith.constant 0 : index
    %c0_6 = arith.constant 0 : index
    %c0_7 = arith.constant 0 : index
    %5 = vector.load %arg4[%c0_4, %c0_5, %c0_6, %c0_7] : memref<1x2x8x16xbf16, #tpu.memory_space<vmem>>, vector<1x2x8x16xbf16>
    %6 = vector.shape_cast %5 : vector<1x2x8x16xbf16> to vector<2x8x16xbf16>
    %c0_8 = arith.constant 0 : index
    %c0_9 = arith.constant 0 : index
    %c0_10 = arith.constant 0 : index
    %c0_11 = arith.constant 0 : index
    %7 = vector.load %arg5[%c0_8, %c0_9, %c0_10, %c0_11] : memref<1x2x8x16xbf16, #tpu.memory_space<vmem>>, vector<1x2x8x16xbf16>
    %8 = vector.shape_cast %7 : vector<1x2x8x16xbf16> to vector<2x8x16xbf16>
    %cst = arith.constant dense<0.000000e+00> : vector<2x8x8xf32>
    %9 = tpu.matmul %4, %6, %cst {dimension_numbers = #tpu.dot_dimension_numbers<[2], [2], [1], [1], [0, 0, 0, 1, 1, 1], [0], [0]>} : vector<2x8x16xbf16>, vector<2x8x16xbf16>, vector<2x8x8xf32> -> vector<2x8x8xf32>
    %c0_12 = arith.constant 0 : index
    %c0_13 = arith.constant 0 : index
    %c0_14 = arith.constant 0 : index
    %c0_15 = arith.constant 0 : index
    %10 = vector.load %arg6[%c0_12, %c0_13, %c0_14, %c0_15] : memref<1x2x8x8xbf16, #tpu.memory_space<vmem>>, vector<1x2x8x8xbf16>
    %11 = vector.shape_cast %10 : vector<1x2x8x8xbf16> to vector<2x8x8xbf16>
    %12 = arith.extf %11 : vector<2x8x8xbf16> to vector<2x8x8xf32>
    %13 = arith.addf %9, %12 : vector<2x8x8xf32>
    %c0_16 = arith.constant 0 : index
    %c0_17 = arith.constant 0 : index
    %c0_18 = arith.constant 0 : index
    %14 = vector.load %arg8[%c0_16, %c0_17, %c0_18] : memref<2x8x1xf32, #tpu.memory_space<vmem>>, vector<2x8x1xf32>
    %cst_19 = arith.constant dense<0xFF800000> : vector<2x8xf32>
    %15 = vector.multi_reduction <maximumf>, %13, %cst_19 [2] : vector<2x8x8xf32> to vector<2x8xf32>
    %16 = vector.shape_cast %15 : vector<2x8xf32> to vector<2x8x1xf32>
    %17 = arith.maximumf %14, %16 : vector<2x8x1xf32>
    %cst_20 = arith.constant 0xFF800000 : f32
    %18 = vector.broadcast %cst_20 : f32 to vector<2x8x1xf32>
    %19 = arith.cmpf oeq, %17, %18 : vector<2x8x1xf32>
    %cst_21 = arith.constant 0.000000e+00 : f32
    %20 = vector.broadcast %cst_21 : f32 to vector<2x8x1xf32>
    %21 = arith.select %19, %20, %17 : vector<2x8x1xi1>, vector<2x8x1xf32>
    %22 = arith.subf %14, %21 : vector<2x8x1xf32>
    %23 = math.exp %22 : vector<2x8x1xf32>
    %24 = vector.broadcast %21 : vector<2x8x1xf32> to vector<2x8x8xf32>
    %25 = arith.subf %13, %24 : vector<2x8x8xf32>
    %26 = math.exp %25 : vector<2x8x8xf32>
    %c0_22 = arith.constant 0 : index
    %c0_23 = arith.constant 0 : index
    %c0_24 = arith.constant 0 : index
    %27 = vector.load %arg9[%c0_22, %c0_23, %c0_24] : memref<2x8x1xf32, #tpu.memory_space<vmem>>, vector<2x8x1xf32>
    %28 = arith.mulf %23, %27 : vector<2x8x1xf32>
    %cst_25 = arith.constant dense<0.000000e+00> : vector<2x8xf32>
    %29 = vector.multi_reduction <add>, %26, %cst_25 [2] : vector<2x8x8xf32> to vector<2x8xf32>
    %30 = vector.shape_cast %29 : vector<2x8xf32> to vector<2x8x1xf32>
    %31 = arith.addf %28, %30 : vector<2x8x1xf32>
    %c0_26 = arith.constant 0 : index
    %c0_27 = arith.constant 0 : index
    %c0_28 = arith.constant 0 : index
    %32 = vector.load %arg9[%c0_26, %c0_27, %c0_28] : memref<2x8x1xf32, #tpu.memory_space<vmem>>, vector<2x8x1xf32>
    tpu.vector_store %arg9[%c0_26, %c0_27, %c0_28], %31 {strides = array<i32>} : memref<2x8x1xf32, #tpu.memory_space<vmem>>, vector<2x8x1xf32>,
    %c0_29 = arith.constant 0 : index
    %c0_30 = arith.constant 0 : index
    %c0_31 = arith.constant 0 : index
    %33 = vector.load %arg10[%c0_29, %c0_30, %c0_31] : memref<2x8x16xf32, #tpu.memory_space<vmem>>, vector<2x8x16xf32>
    %34 = vector.broadcast %23 : vector<2x8x1xf32> to vector<2x8x16xf32>
    %35 = arith.mulf %34, %33 : vector<2x8x16xf32>
    %36 = arith.truncf %26 : vector<2x8x8xf32> to vector<2x8x8xbf16>
    %cst_32 = arith.constant dense<0.000000e+00> : vector<2x8x16xf32>
    %37 = tpu.matmul %36, %8, %cst_32 {dimension_numbers = #tpu.dot_dimension_numbers<[2], [1], [1], [2], [0, 0, 0, 1, 1, 2], [0], [0]>} : vector<2x8x8xbf16>, vector<2x8x16xbf16>, vector<2x8x16xf32> -> vector<2x8x16xf32>
    %38 = arith.addf %35, %37 : vector<2x8x16xf32>
    %c0_33 = arith.constant 0 : index
    %c0_34 = arith.constant 0 : index
    %c0_35 = arith.constant 0 : index
    %39 = vector.load %arg10[%c0_33, %c0_34, %c0_35] : memref<2x8x16xf32, #tpu.memory_space<vmem>>, vector<2x8x16xf32>
    tpu.vector_store %arg10[%c0_33, %c0_34, %c0_35], %38 {strides = array<i32>} : memref<2x8x16xf32, #tpu.memory_space<vmem>>, vector<2x8x16xf32>,
    %c0_36 = arith.constant 0 : index
    %c0_37 = arith.constant 0 : index
    %c0_38 = arith.constant 0 : index
    %40 = vector.load %arg8[%c0_36, %c0_37, %c0_38] : memref<2x8x1xf32, #tpu.memory_space<vmem>>, vector<2x8x1xf32>
    tpu.vector_store %arg8[%c0_36, %c0_37, %c0_38], %17 {strides = array<i32>} : memref<2x8x1xf32, #tpu.memory_space<vmem>>, vector<2x8x1xf32>,
    %c0_i32_39 = arith.constant 0 : i32
    %41 = arith.cmpi eq, %arg2, %c0_i32_39 : i32
    %42 = arith.extui %41 : i1 to i32
    %c0_i32_40 = arith.constant 0 : i32
    %43 = arith.cmpi ne, %42, %c0_i32_40 : i32
    scf.if %43 {
      %c0_41 = arith.constant 0 : index
      %c0_42 = arith.constant 0 : index
      %c0_43 = arith.constant 0 : index
      %44 = vector.load %arg9[%c0_41, %c0_42, %c0_43] : memref<2x8x1xf32, #tpu.memory_space<vmem>>, vector<2x8x1xf32>
      %cst_44 = arith.constant 0.000000e+00 : f32
      %45 = vector.broadcast %cst_44 : f32 to vector<2x8x1xf32>
      %46 = arith.cmpf ogt, %44, %45 : vector<2x8x1xf32>
      %cst_45 = arith.constant 1.000000e+00 : f32
      %47 = vector.broadcast %cst_45 : f32 to vector<2x8x1xf32>
      %48 = arith.select %46, %44, %47 : vector<2x8x1xi1>, vector<2x8x1xf32>
      %c0_46 = arith.constant 0 : index
      %c0_47 = arith.constant 0 : index
      %c0_48 = arith.constant 0 : index
      %49 = vector.load %arg10[%c0_46, %c0_47, %c0_48] : memref<2x8x16xf32, #tpu.memory_space<vmem>>, vector<2x8x16xf32>
      %50 = tpu.reciprocal %48 {approx = true} : vector<2x8x1xf32> -> vector<2x8x1xf32>
      %51 = vector.broadcast %50 : vector<2x8x1xf32> to vector<2x8x16xf32>
      %52 = arith.mulf %49, %51 : vector<2x8x16xf32>
      %53 = arith.truncf %52 : vector<2x8x16xf32> to vector<2x8x16xbf16>
      %c0_49 = arith.constant 0 : index
      %c0_50 = arith.constant 0 : index
      %c0_51 = arith.constant 0 : index
      %c0_52 = arith.constant 0 : index
      %54 = vector.load %arg7[%c0_49, %c0_50, %c0_51, %c0_52] : memref<1x2x8x16xbf16, #tpu.memory_space<vmem>>, vector<1x2x8x16xbf16>
      %55 = vector.shape_cast %54 : vector<1x2x8x16xbf16> to vector<2x8x16xbf16>
      %56 = vector.shape_cast %53 : vector<2x8x16xbf16> to vector<1x2x8x16xbf16>
      tpu.vector_store %arg7[%c0_49, %c0_50, %c0_51, %c0_52], %56 {strides = array<i32>} : memref<1x2x8x16xbf16, #tpu.memory_space<vmem>>, vector<1x2x8x16xbf16>,
    } else {
    }
    return
  }
  func.func @transform_0(%arg0: i32, %arg1: i32, %arg2: i32) -> (i32, i32, i32, i32) {
    %c0_i32 = arith.constant 0 : i32
    %c0_i32_0 = arith.constant 0 : i32
    %c0_i32_1 = arith.constant 0 : i32
    return %arg0, %c0_i32, %arg1, %c0_i32_0 : i32, i32, i32, i32
  }
  func.func @transform_1(%arg0: i32, %arg1: i32, %arg2: i32) -> (i32, i32, i32, i32) {
    %c0_i32 = arith.constant 0 : i32
    %c0_i32_0 = arith.constant 0 : i32
    %c0_i32_1 = arith.constant 0 : i32
    return %arg0, %c0_i32, %arg2, %c0_i32_0 : i32, i32, i32, i32
  }
  func.func @transform_2(%arg0: i32, %arg1: i32, %arg2: i32) -> (i32, i32, i32, i32) {
    %c0_i32 = arith.constant 0 : i32
    %c0_i32_0 = arith.constant 0 : i32
    %c0_i32_1 = arith.constant 0 : i32
    return %arg0, %c0_i32, %arg2, %c0_i32_0 : i32, i32, i32, i32
  }
  func.func @transform_3(%arg0: i32, %arg1: i32, %arg2: i32) -> (i32, i32, i32, i32) {
    %c0_i32 = arith.constant 0 : i32
    %c0_i32_0 = arith.constant 0 : i32
    return %arg0, %c0_i32, %arg1, %arg2 : i32, i32, i32, i32
  }
  func.func @transform_4(%arg0: i32, %arg1: i32, %arg2: i32) -> (i32, i32, i32, i32) {
    %c0_i32 = arith.constant 0 : i32
    %c0_i32_0 = arith.constant 0 : i32
    %c0_i32_1 = arith.constant 0 : i32
    return %arg0, %c0_i32, %arg1, %c0_i32_0 : i32, i32, i32, i32
  }
}

</mosaic_0001>

<llo_original>
// kernel: tpu_custom_call.1
$region0: #{tpu_custom_call.1}
  #allocation0 [shape = 'u32[]', space=smem, size = 0x4, offset = 0x4, fixed_abs, tag = 'smem constant byte address 0x4 - core index']
  #allocation1 [shape = 'u32[144,128]{1,0:T(1,128)}', space=vmem, size = 0x12000, scoped, tag = 'internal scratch']
  #allocation2 [shape = 'f32[2,8,1]{2,1,0:T(8,128)}', space=vmem, size = 0x2000, scoped, tag = 'scratch operand']
  #allocation3 [shape = 'f32[2,8,1]{2,1,0:T(8,128)}', space=vmem, size = 0x2000, scoped, tag = 'scratch operand']
  #allocation4 [shape = 'f32[2,8,16]{2,1,0:T(8,128)}', space=vmem, size = 0x2000, scoped, tag = 'scratch operand']
  %s0 = inlined_call_operand.hbm [shape: bf16[2,2,8,16], index: 0, kind: input, shape index: {}]
  %s1 = inlined_call_operand.hbm [shape: bf16[2,2,8,16], index: 1, kind: input, shape index: {}]
  %s2 = inlined_call_operand.hbm [shape: bf16[2,2,8,16], index: 2, kind: input, shape index: {}]
  %s3 = inlined_call_operand.hbm [shape: bf16[2,2,8,8], index: 3, kind: input, shape index: {}]
  %s4 = inlined_call_operand.hbm [shape: bf16[2,2,8,16], index: 4, kind: output, shape index: {}]
  %s5 = sld [smem:[#allocation0]]
  $region73: #{tpu_custom_call.1} parent=0
    _
  %s7 = ssub.s32 1, %s5
  %s8 = scalar_select 0, %s7, %s5
  $region1: #{tpu_custom_call.1} parent=0
    #allocation5 [shape = 'u8[8192]{0}', space=vmem, size = 0x2000, scoped, tag = 'input window, operand 0']
    #allocation6 [shape = 's32[2]{0}', space=sflag, size = 0x8, scoped, tag = 'scoped memory for tpu_custom_call.1']
    #allocation7 [shape = 's32[2]{0}', space=sflag, size = 0x8, scoped, tag = 'scoped memory for tpu_custom_call.1']
    #allocation8 [shape = 'u8[8192]{0}', space=vmem, size = 0x2000, scoped, tag = 'input window, operand 1']
    #allocation9 [shape = 's32[2]{0}', space=sflag, size = 0x8, scoped, tag = 'scoped memory for tpu_custom_call.1']
    #allocation10 [shape = 'u8[8192]{0}', space=vmem, size = 0x2000, scoped, tag = 'input window, operand 2']
    #allocation11 [shape = 'u8[8192]{0}', space=vmem, size = 0x2000, scoped, tag = 'input window, operand 3']
    #allocation12 [shape = 's32[2]{0}', space=sflag, size = 0x8, scoped, tag = 'scoped memory for tpu_custom_call.1']
    #allocation13 [shape = 'u8[8192]{0}', space=vmem, size = 0x2000, scoped, tag = 'output window, operand 0']
    %9 = vsyncpa [#allocation6], 0
    %s10 = scalar_lea.sflag [#allocation6], 1
    %11 = vsyncpa %s10, 0
    %12 = vsyncpa [#allocation9], 0
    %s13 = scalar_lea.sflag [#allocation9], 1
    %14 = vsyncpa %s13, 0
    %15 = vsyncpa [#allocation12], 0
    %s16 = scalar_lea.sflag [#allocation12], 1
    %17 = vsyncpa %s16, 0
    %18 = vsyncpa [#allocation7], 0
    %s19 = scalar_lea.sflag [#allocation7], 1
    %20 = vsyncpa %s19, 0
    loop: start=0, step=1, limit=4
    $region2: #{tpu_custom_call.1} parent=1 // loop_pre_header
      _
    $region3: #{tpu_custom_call.1} parent=1 // loop_header
      %s22 = sphi 0, %s26
      %p23 = scmp.ge.s32.totalorder %s22, 4
      %s29 = sphi 0, %s48
      %s30 = sphi 0, %s44
      %s31 = sphi 0, %s40
      %s32 = sphi 0, %s29
      %s33 = sphi 0, %s30
      %s34 = sphi 0, %s31
      %s35 = sphi 0, %s32
      %s36 = sphi 0, %s33
      %s37 = sphi 0, %s34
      %s53 = sphi 0, %s55
      %s56 = sphi 0, %s53
      %s57 = sphi 0, %s56
      %s73 = sphi 0, %s57
      %s81 = sphi 0, %s83
      %s84 = sphi 0, %s81
      %s85 = sphi 0, %s84
      %s101 = sphi 0, %s85
      %s109 = sphi 0, %s111
      %s112 = sphi 0, %s109
      %s113 = sphi 0, %s112
      %s129 = sphi 0, %s113
      %s139 = sphi 0, %s141
      %s142 = sphi 0, %s139
      %s143 = sphi 0, %s142
      %s159 = sphi 0, %s143
      %s167 = sphi 0, %s169
      %s170 = sphi 0, %s167
      %s171 = sphi 0, %s170
      %s187 = sphi 0, %s171
    $region4: #{tpu_custom_call.1} parent=1 // loop_header_branch
      %25 = sbr.rel (%p23) target = $region8
    $region5: #{tpu_custom_call.1} parent=1 // loop_body
      %s27 = ssub.s32 %s22, 1
      %s28 = ssub.s32 %s22, 2
      %s38 = sadd.s32 1, %s31
      %p39 = scmp.ge.s32.totalorder %s38, 1
      %s40 = scalar_select %p39, 0, %s38
      %s41 = sadd.s32 1, %s30
      %s42 = scalar_select %p39, %s41, %s30
      %p43 = scmp.ge.s32.totalorder %s42, 1
      %s44 = scalar_select %p43, 0, %s42
      %s45 = sadd.s32 1, %s29
      %s46 = scalar_select %p43, %s45, %s29
      %p47 = scmp.ge.s32.totalorder %s46, 2
      %s48 = scalar_select %p47, 0, %s46
      %s49 = ssub.s32 %s29, %s48
      %s50 = ssub.s32 %s30, %s44
      %s51 = sor.u32 %s49, %s50
      %p52 = scmp.eq.s32.totalorder %s51, 0
      %s54 = sadd.s32 %s53, 1
      %s55 = scalar_select %p52, %s53, %s54
      %p58 = pneg %p52
      %p59 = scmp.eq.s32.totalorder %s22, 1
      %p60 = por %p58, %p59
      %p61 = scmp.ne.s32.totalorder %s53, %s56
      %p62 = scmp.eq.s32.totalorder %s22, 0
      %p63 = por %p61, %p62
      %p64 = scmp.ne.s32.totalorder %s53, %s56
      %p65 = scmp.eq.s32.totalorder %s27, 1
      %p66 = por %p64, %p65
      %p67 = scmp.ne.s32.totalorder %s56, %s57
      %p68 = scmp.eq.s32.totalorder %s27, 0
      %p69 = por %p67, %p68
      %p70 = scmp.ne.s32.totalorder %s56, %s57
      %p71 = scmp.eq.s32.totalorder %s28, 1
      %p72 = por %p70, %p71
      %p74 = scmp.ne.s32.totalorder %s57, %s73
      %p75 = scmp.eq.s32.totalorder %s28, 0
      %p76 = por %p74, %p75
      %s77 = ssub.s32 %s29, %s48
      %s78 = ssub.s32 %s31, %s40
      %s79 = sor.u32 %s77, %s78
      %p80 = scmp.eq.s32.totalorder %s79, 0
      %s82 = sadd.s32 %s81, 1
      %s83 = scalar_select %p80, %s81, %s82
      %p86 = pneg %p80
      %p87 = scmp.eq.s32.totalorder %s22, 1
      %p88 = por %p86, %p87
      %p89 = scmp.ne.s32.totalorder %s81, %s84
      %p90 = scmp.eq.s32.totalorder %s22, 0
      %p91 = por %p89, %p90
      %p92 = scmp.ne.s32.totalorder %s81, %s84
      %p93 = scmp.eq.s32.totalorder %s27, 1
      %p94 = por %p92, %p93
      %p95 = scmp.ne.s32.totalorder %s84, %s85
      %p96 = scmp.eq.s32.totalorder %s27, 0
      %p97 = por %p95, %p96
      %p98 = scmp.ne.s32.totalorder %s84, %s85
      %p99 = scmp.eq.s32.totalorder %s28, 1
      %p100 = por %p98, %p99
      %p102 = scmp.ne.s32.totalorder %s85, %s101
      %p103 = scmp.eq.s32.totalorder %s28, 0
      %p104 = por %p102, %p103
      %s105 = ssub.s32 %s29, %s48
      %s106 = ssub.s32 %s31, %s40
      %s107 = sor.u32 %s105, %s106
      %p108 = scmp.eq.s32.totalorder %s107, 0
      %s110 = sadd.s32 %s109, 1
      %s111 = scalar_select %p108, %s109, %s110
      %p114 = pneg %p108
      %p115 = scmp.eq.s32.totalorder %s22, 1
      %p116 = por %p114, %p115
      %p117 = scmp.ne.s32.totalorder %s109, %s112
      %p118 = scmp.eq.s32.totalorder %s22, 0
      %p119 = por %p117, %p118
      %p120 = scmp.ne.s32.totalorder %s109, %s112
      %p121 = scmp.eq.s32.totalorder %s27, 1
      %p122 = por %p120, %p121
      %p123 = scmp.ne.s32.totalorder %s112, %s113
      %p124 = scmp.eq.s32.totalorder %s27, 0
      %p125 = por %p123, %p124
      %p126 = scmp.ne.s32.totalorder %s112, %s113
      %p127 = scmp.eq.s32.totalorder %s28, 1
      %p128 = por %p126, %p127
      %p130 = scmp.ne.s32.totalorder %s113, %s129
      %p131 = scmp.eq.s32.totalorder %s28, 0
      %p132 = por %p130, %p131
      %s133 = ssub.s32 %s29, %s48
      %s134 = ssub.s32 %s30, %s44
      %s135 = sor.u32 %s133, %s134
      %s136 = ssub.s32 %s31, %s40
      %s137 = sor.u32 %s135, %s136
      %p138 = scmp.eq.s32.totalorder %s137, 0
      %s140 = sadd.s32 %s139, 1
      %s141 = scalar_select %p138, %s139, %s140
      %p144 = pneg %p138
      %p145 = scmp.eq.s32.totalorder %s22, 1
      %p146 = por %p144, %p145
      %p147 = scmp.ne.s32.totalorder %s139, %s142
      %p148 = scmp.eq.s32.totalorder %s22, 0
      %p149 = por %p147, %p148
      %p150 = scmp.ne.s32.totalorder %s139, %s142
      %p151 = scmp.eq.s32.totalorder %s27, 1
      %p152 = por %p150, %p151
      %p153 = scmp.ne.s32.totalorder %s142, %s143
      %p154 = scmp.eq.s32.totalorder %s27, 0
      %p155 = por %p153, %p154
      %p156 = scmp.ne.s32.totalorder %s142, %s143
      %p157 = scmp.eq.s32.totalorder %s28, 1
      %p158 = por %p156, %p157
      %p160 = scmp.ne.s32.totalorder %s143, %s159
      %p161 = scmp.eq.s32.totalorder %s28, 0
      %p162 = por %p160, %p161
      %s163 = ssub.s32 %s29, %s48
      %s164 = ssub.s32 %s30, %s44
      %s165 = sor.u32 %s163, %s164
      %p166 = scmp.eq.s32.totalorder %s165, 0
      %s168 = sadd.s32 %s167, 1
      %s169 = scalar_select %p166, %s167, %s168
      %p172 = pneg %p166
      %p173 = scmp.eq.s32.totalorder %s22, 1
      %p174 = por %p172, %p173
      %p175 = scmp.ne.s32.totalorder %s167, %s170
      %p176 = scmp.eq.s32.totalorder %s22, 0
      %p177 = por %p175, %p176
      %p178 = scmp.ne.s32.totalorder %s167, %s170
      %p179 = scmp.eq.s32.totalorder %s27, 1
      %p180 = por %p178, %p179
      %p181 = scmp.ne.s32.totalorder %s170, %s171
      %p182 = scmp.eq.s32.totalorder %s27, 0
      %p183 = por %p181, %p182
      %p184 = scmp.ne.s32.totalorder %s170, %s171
      %p185 = scmp.eq.s32.totalorder %s28, 1
      %p186 = por %p184, %p185
      %p188 = scmp.ne.s32.totalorder %s171, %s187
      %p189 = scmp.eq.s32.totalorder %s28, 0
      %p190 = por %p188, %p189
      %p191 = scmp.le.s32.totalorder 1, %s22
      %p192 = scmp.lt.s32.totalorder %s22, 3
      %p193 = pnand %p191, %p192
      %p194 = pneg %p193
      // Predicated region
      $region9: #{tpu_custom_call.1} parent=5 // pred_check
        _
      $region10: #{tpu_custom_call.1} parent=5 // pred_check_branch
        %196 = sbr.rel (%p193) target = $region12
      $region11: #{tpu_custom_call.1} parent=5 // pred_region
        %s197 = ssub.s32 %s22, 1
      $region12: #{tpu_custom_call.1} parent=5 // pred_fallthru
        _
      %p198 = scmp.lt.s32.totalorder %s22, 2
      // Predicated region
      $region13: #{tpu_custom_call.1} parent=5 // pred_check
        %p199 = pneg %p198
      $region14: #{tpu_custom_call.1} parent=5 // pred_check_branch
        %201 = sbr.rel (%p199) target = $region16
      $region15: #{tpu_custom_call.1} parent=5 // pred_region
        // Predicated region
        $region17: #{tpu_custom_call.1} parent=15 // pred_check
          %p202 = pneg %p63
        $region18: #{tpu_custom_call.1} parent=15 // pred_check_branch
          %204 = sbr.rel (%p202) target = $region20
        $region19: #{tpu_custom_call.1} parent=15 // pred_region
          %s205 = sand.u32 %s53, 1
          %s206 = scalar_lea.sflag [#allocation6], %s205
          %s207 = sand.u32 %s53, 1
          %s208 = smul.addr %s207, 8
          %s209 = scalar_lea.vmem [#allocation5], %s208
          %s211 = ssub.s32 128, 128
          %212 = vsyncadd %s206, %s211
          %s213 = smul.addr %s29, 2
          %s214 = sadd.s32 %s30, %s213
          %s215 = smul.addr %s214, 64
          %s216 = scalar_lea.hbm %s0, %s215
          %s217 = sshll.u32 %s209, 4
          %s218 = int_to_ptr.vmem [resolvable:$true] %s217
          %223 = dma.hbm_to_vmem [thread:$0]  %s216, 128, %s218, %s206, 64, 64, 4
        $region20: #{tpu_custom_call.1} parent=15 // pred_fallthru
          _
        // Predicated region
        $region21: #{tpu_custom_call.1} parent=15 // pred_check
          %p224 = pneg %p91
        $region22: #{tpu_custom_call.1} parent=15 // pred_check_branch
          %226 = sbr.rel (%p224) target = $region24
        $region23: #{tpu_custom_call.1} parent=15 // pred_region
          %s227 = sand.u32 %s22, 1
          %s228 = scalar_lea.sflag [#allocation9], %s227
          %s229 = sand.u32 %s81, 1
          %s230 = smul.addr %s229, 8
          %s231 = scalar_lea.vmem [#allocation8], %s230
          %s233 = ssub.s32 128, 128
          %234 = vsyncadd %s228, %s233
          %s235 = smul.addr %s29, 2
          %s236 = sadd.s32 %s31, %s235
          %s237 = smul.addr %s236, 64
          %s238 = scalar_lea.hbm %s1, %s237
          %s239 = sshll.u32 %s231, 4
          %s240 = int_to_ptr.vmem [resolvable:$true] %s239
          %245 = dma.hbm_to_vmem [thread:$0]  %s238, 128, %s240, %s228, 64, 64, 4
        $region24: #{tpu_custom_call.1} parent=15 // pred_fallthru
          _
        // Predicated region
        $region25: #{tpu_custom_call.1} parent=15 // pred_check
          %p246 = pneg %p119
        $region26: #{tpu_custom_call.1} parent=15 // pred_check_branch
          %248 = sbr.rel (%p246) target = $region28
        $region27: #{tpu_custom_call.1} parent=15 // pred_region
          %s249 = sand.u32 %s22, 1
          %s250 = scalar_lea.sflag [#allocation9], %s249
          %s251 = sand.u32 %s109, 1
          %s252 = smul.addr %s251, 8
          %s253 = scalar_lea.vmem [#allocation10], %s252
          %s255 = ssub.s32 128, 128
          %256 = vsyncadd %s250, %s255
          %s257 = smul.addr %s29, 2
          %s258 = sadd.s32 %s31, %s257
          %s259 = smul.addr %s258, 64
          %s260 = scalar_lea.hbm %s2, %s259
          %s261 = sshll.u32 %s253, 4
          %s262 = int_to_ptr.vmem [resolvable:$true] %s261
          %267 = dma.hbm_to_vmem [thread:$0]  %s260, 128, %s262, %s250, 64, 64, 4
        $region28: #{tpu_custom_call.1} parent=15 // pred_fallthru
          _
        // Predicated region
        $region29: #{tpu_custom_call.1} parent=15 // pred_check
          %p268 = pneg %p149
        $region30: #{tpu_custom_call.1} parent=15 // pred_check_branch
          %270 = sbr.rel (%p268) target = $region32
        $region31: #{tpu_custom_call.1} parent=15 // pred_region
          %s271 = sand.u32 %s139, 1
          %s272 = scalar_lea.sflag [#allocation12], %s271
          %s273 = sand.u32 %s139, 1
          %s274 = smul.addr %s273, 8
          %s275 = scalar_lea.vmem [#allocation11], %s274
          %s277 = ssub.s32 128, 128
          %278 = vsyncadd %s272, %s277
          %s279 = sadd.s32 %s31, %s30
          %s280 = smul.addr %s29, 2
          %s281 = sadd.s32 %s279, %s280
          %s282 = smul.addr %s281, 64
          %s283 = scalar_lea.hbm %s3, %s282
          %s284 = sshll.u32 %s275, 4
          %s285 = int_to_ptr.vmem [resolvable:$true] %s284
          %290 = dma.hbm_to_vmem [thread:$0]  %s283, 128, %s285, %s272, 64, 64, 4
        $region32: #{tpu_custom_call.1} parent=15 // pred_fallthru
          _
      $region16: #{tpu_custom_call.1} parent=5 // pred_fallthru
        _
      %p291 = scmp.le.s32.totalorder 1, %s22
      %p292 = scmp.lt.s32.totalorder %s22, 3
      %p293 = pnand %p291, %p292
      %p294 = pneg %p293
      // Predicated region
      $region33: #{tpu_custom_call.1} parent=5 // pred_check
        _
      $region34: #{tpu_custom_call.1} parent=5 // pred_check_branch
        %296 = sbr.rel (%p293) target = $region36
      $region35: #{tpu_custom_call.1} parent=5 // pred_region
        %s297 = ssub.s32 %s22, 1
        %s298 = sand.u32 %s56, 1
        %s299 = scalar_lea.sflag [#allocation6], %s298
        %s300 = sand.u32 %s56, 1
        %s301 = smul.addr %s300, 8
        %s302 = scalar_lea.vmem [#allocation5], %s301
        // Predicated region
        $region37: #{tpu_custom_call.1} parent=35 // pred_check
          %p303 = pneg %p69
        $region38: #{tpu_custom_call.1} parent=35 // pred_check_branch
          %305 = sbr.rel (%p303) target = $region40
        $region39: #{tpu_custom_call.1} parent=35 // pred_region
          %306 = dma.done %s299, 128
        $region40: #{tpu_custom_call.1} parent=35 // pred_fallthru
          _
        %s307 = sand.u32 %s27, 1
        %s308 = scalar_lea.sflag [#allocation9], %s307
        %s309 = sand.u32 %s84, 1
        %s310 = smul.addr %s309, 8
        %s311 = scalar_lea.vmem [#allocation8], %s310
        // Predicated region
        $region41: #{tpu_custom_call.1} parent=35 // pred_check
          %p312 = pneg %p97
        $region42: #{tpu_custom_call.1} parent=35 // pred_check_branch
          %314 = sbr.rel (%p312) target = $region44
        $region43: #{tpu_custom_call.1} parent=35 // pred_region
          %315 = dma.done %s308, 128
        $region44: #{tpu_custom_call.1} parent=35 // pred_fallthru
          _
        %s316 = sand.u32 %s27, 1
        %s317 = scalar_lea.sflag [#allocation9], %s316
        %s318 = sand.u32 %s112, 1
        %s319 = smul.addr %s318, 8
        %s320 = scalar_lea.vmem [#allocation10], %s319
        // Predicated region
        $region45: #{tpu_custom_call.1} parent=35 // pred_check
          %p321 = pneg %p125
        $region46: #{tpu_custom_call.1} parent=35 // pred_check_branch
          %323 = sbr.rel (%p321) target = $region48
        $region47: #{tpu_custom_call.1} parent=35 // pred_region
          %324 = dma.done %s317, 128
        $region48: #{tpu_custom_call.1} parent=35 // pred_fallthru
          _
        %s325 = sand.u32 %s142, 1
        %s326 = scalar_lea.sflag [#allocation12], %s325
        %s327 = sand.u32 %s142, 1
        %s328 = smul.addr %s327, 8
        %s329 = scalar_lea.vmem [#allocation11], %s328
        // Predicated region
        $region49: #{tpu_custom_call.1} parent=35 // pred_check
          %p330 = pneg %p155
        $region50: #{tpu_custom_call.1} parent=35 // pred_check_branch
          %332 = sbr.rel (%p330) target = $region52
        $region51: #{tpu_custom_call.1} parent=35 // pred_region
          %333 = dma.done %s326, 128
        $region52: #{tpu_custom_call.1} parent=35 // pred_fallthru
          _
        %s334 = sand.u32 %s56, 1
        %s335 = scalar_lea.sflag [#allocation6], %s334
        %s336 = sand.u32 %s56, 1
        %s337 = smul.addr %s336, 8
        %s338 = scalar_lea.vmem [#allocation5], %s337
        %p339 = pneg %p69
        %p340 = pneg %p66
        %s341 = sand.u32 %s27, 1
        %s342 = scalar_lea.sflag [#allocation9], %s341
        %s343 = sand.u32 %s84, 1
        %s344 = smul.addr %s343, 8
        %s345 = scalar_lea.vmem [#allocation8], %s344
        %p346 = pneg %p97
        %p347 = pneg %p94
        %s348 = sand.u32 %s27, 1
        %s349 = scalar_lea.sflag [#allocation9], %s348
        %s350 = sand.u32 %s112, 1
        %s351 = smul.addr %s350, 8
        %s352 = scalar_lea.vmem [#allocation10], %s351
        %p353 = pneg %p125
        %p354 = pneg %p122
        %s355 = sand.u32 %s142, 1
        %s356 = scalar_lea.sflag [#allocation12], %s355
        %s357 = sand.u32 %s142, 1
        %s358 = smul.addr %s357, 8
        %s359 = scalar_lea.vmem [#allocation11], %s358
        %p360 = pneg %p155
        %p361 = pneg %p152
        %p362 = pneg %p183
        %p363 = pneg %p180
        %s364 = sand.u32 %s170, 1
        %s365 = scalar_lea.sflag [#allocation7], %s364
        %s366 = sand.u32 %s170, 1
        %s367 = smul.addr %s366, 8
        %s368 = scalar_lea.vmem [#allocation13], %s367
        %p370 = scmp.eq.s32.totalorder %s34, 0
        // Predicated region
        $region53: #{tpu_custom_call.1} parent=35 // pred_check
          %p371 = pneg %p370
        $region54: #{tpu_custom_call.1} parent=35 // pred_check_branch
          %373 = sbr.rel (%p371) target = $region56
        $region55: #{tpu_custom_call.1} parent=35 // pred_region
          %vm374 = vcmask 7168
          %375 = vst.msk [vmem:[#allocation2] sm:$0xff] %vm374, -inf
          %376 = vst.msk [vmem:[#allocation2 + $0x8] sm:$0xff] %vm374, -inf
          %377 = vst.msk [vmem:[#allocation3] sm:$0xff] %vm374, 0.0
          %378 = vst.msk [vmem:[#allocation3 + $0x8] sm:$0xff] %vm374, 0.0
          %vm379 = vcmask 130048
          %380 = vst.msk [vmem:[#allocation4] sm:$0xff] %vm379, 0.0
          %381 = vst.msk [vmem:[#allocation4 + $0x8] sm:$0xff] %vm379, 0.0
        $region56: #{tpu_custom_call.1} parent=35 // pred_fallthru
          _
        %v382 = vld [vmem:[%s302] sm:$0xf]
        %v383 = vld [vmem:[%s302 + $0x4] sm:$0xf]
        %v384 = vld [vmem:[%s311] sm:$0xf]
        %v385 = vld [vmem:[%s311 + $0x4] sm:$0xf]
        %v386 = vld [vmem:[%s320] sm:$0xf]
        %v387 = vld [vmem:[%s320 + $0x4] sm:$0xf]
        %v388 = vld [vmem:[%s329] sm:$0xf]
        %v389 = vld [vmem:[%s329 + $0x4] sm:$0xf]
        %v390 = vunpack.c.l.bf16 %v388
        %v391 = vunpack.c.l.bf16 %v389
        %vm392 = vcmask 130048
        %v394 = vsel %vm392, %v382, 0
        %v397 = vsel %vm392, %v384, 0
        %399 = vmatprep.subr.bf16.mxu0 0
        %400 = vmatpush1.bf16.xpose.msra.mxu0 0
        %401 = vmatprep.subr.bf16.mxu0 0
        %402 = vmatpush1.bf16.xpose.msra.mxu0 0
        %403 = vmatprep.subr.bf16.mxu0 0
        %404 = vmatpush1.bf16.xpose.msra.mxu0 0
        %405 = vmatprep.subr.bf16.mxu0 0
        %406 = vmatpush1.bf16.xpose.msra.mxu0 0
        %407 = vmatprep.subr.bf16.mxu0 0
        %408 = vmatpush1.bf16.xpose.msra.mxu0 0
        %409 = vmatprep.subr.bf16.mxu0 0
        %410 = vmatpush1.bf16.xpose.msra.mxu0 0
        %411 = vmatprep.subr.bf16.mxu0 0
        %412 = vmatpush1.bf16.xpose.msra.mxu0 0
        %413 = vmatprep.subr.bf16.mxu0 0
        %414 = vmatpush1.bf16.xpose.msra.mxu0 %v397
        %415 = vmatprep.subr.bf16.mxu0 0
        %416 = vmatpush2.bf16.xpose.msra.mxu0 0
        %417 = vmatprep.subr.bf16.mxu0 0
        %418 = vmatpush2.bf16.xpose.msra.mxu0 0
        %419 = vmatprep.subr.bf16.mxu0 0
        %420 = vmatpush2.bf16.xpose.msra.mxu0 0
        %421 = vmatprep.subr.bf16.mxu0 0
        %422 = vmatpush2.bf16.xpose.msra.mxu0 0
        %423 = vmatprep.subr.bf16.mxu0 0
        %424 = vmatpush2.bf16.xpose.msra.mxu0 0
        %425 = vmatprep.subr.bf16.mxu0 0
        %426 = vmatpush2.bf16.xpose.msra.mxu0 0
        %427 = vmatprep.subr.bf16.mxu0 0
        %428 = vmatpush2.bf16.xpose.msra.mxu0 0
        %429 = vmatprep.subr.bf16.mxu0 0
        %430 = vmatpush2.bf16.xpose.msra.mxu0 0
        %431 = vmatprep.mubr.bf16.mxu0 0
        %432 = vmatmul.mubr.bf16.gmra.mxu0 %v394
        %v433 = vpop.f32.mrf.mxu0
        %v434 = vadd.f32 %v390, %v433
        %v435 = vpop.f32.mrf.mxu0
        %v436 = vpop.f32.mrf.mxu0
        %v437 = vpop.f32.mrf.mxu0
        %438 = vdwg.mxu0
        %v440 = vsel %vm392, %v383, 0
        %v443 = vsel %vm392, %v385, 0
        %445 = vmatprep.subr.bf16.mxu0 0
        %446 = vmatpush1.bf16.xpose.msra.mxu0 0
        %447 = vmatprep.subr.bf16.mxu0 0
        %448 = vmatpush1.bf16.xpose.msra.mxu0 0
        %449 = vmatprep.subr.bf16.mxu0 0
        %450 = vmatpush1.bf16.xpose.msra.mxu0 0
        %451 = vmatprep.subr.bf16.mxu0 0
        %452 = vmatpush1.bf16.xpose.msra.mxu0 0
        %453 = vmatprep.subr.bf16.mxu0 0
        %454 = vmatpush1.bf16.xpose.msra.mxu0 0
        %455 = vmatprep.subr.bf16.mxu0 0
        %456 = vmatpush1.bf16.xpose.msra.mxu0 0
        %457 = vmatprep.subr.bf16.mxu0 0
        %458 = vmatpush1.bf16.xpose.msra.mxu0 0
        %459 = vmatprep.subr.bf16.mxu0 0
        %460 = vmatpush1.bf16.xpose.msra.mxu0 %v443
        %461 = vmatprep.subr.bf16.mxu0 0
        %462 = vmatpush2.bf16.xpose.msra.mxu0 0
        %463 = vmatprep.subr.bf16.mxu0 0
        %464 = vmatpush2.bf16.xpose.msra.mxu0 0
        %465 = vmatprep.subr.bf16.mxu0 0
        %466 = vmatpush2.bf16.xpose.msra.mxu0 0
        %467 = vmatprep.subr.bf16.mxu0 0
        %468 = vmatpush2.bf16.xpose.msra.mxu0 0
        %469 = vmatprep.subr.bf16.mxu0 0
        %470 = vmatpush2.bf16.xpose.msra.mxu0 0
        %471 = vmatprep.subr.bf16.mxu0 0
        %472 = vmatpush2.bf16.xpose.msra.mxu0 0
        %473 = vmatprep.subr.bf16.mxu0 0
        %474 = vmatpush2.bf16.xpose.msra.mxu0 0
        %475 = vmatprep.subr.bf16.mxu0 0
        %476 = vmatpush2.bf16.xpose.msra.mxu0 0
        %477 = vmatprep.mubr.bf16.mxu0 0
        %478 = vmatmul.mubr.bf16.gmra.mxu0 %v440
        %v479 = vpop.f32.mrf.mxu0
        %v480 = vadd.f32 %v391, %v479
        %v481 = vpop.f32.mrf.mxu0
        %v482 = vpop.f32.mrf.mxu0
        %v483 = vpop.f32.mrf.mxu0
        %484 = vdwg.mxu0
        %v485 = vld [vmem:[#allocation2] sm:$0xff]
        %v486 = vld [vmem:[#allocation2 + $0x8] sm:$0xff]
        %vm487 = vcmask 64512
        %v488 = vsel %vm487, %v434, -inf
        %489 = vmax.xlane.f32.xlu0 %v488
        %v490 = vpop.xlane.xlu0 %489
        %v491 = vsel %vm487, %v480, -inf
        %492 = vmax.xlane.f32.xlu0 %v491
        %v493 = vpop.xlane.xlu0 %492
        %v494 = vmax.f32 %v485, %v490
        %v495 = vmax.f32 %v486, %v493
        %vm496 = vcmp.eq.f32.partialorder %v494, -inf
        %vm497 = vcmp.eq.f32.partialorder %v495, -inf
        %v498 = vsel %vm496, 0.0, %v494
        %v499 = vsel %vm497, 0.0, %v495
        %v500 = vsub.f32 %v485, %v498
        %v501 = vsub.f32 %v486, %v499
        %v502 = vmul.f32 %v500, 1.442695
        %v503 = vpow.pop %v502
        %v504 = vmul.f32 %v501, 1.442695
        %v505 = vpow.pop %v504
        %507 = vset.pattern.permute.xlu0 0
        %508 = vperm.xlu0 %507, %v498
        %v509 = vpop.permute.xlu0 %508
        %512 = vset.pattern.permute.xlu0 0
        %513 = vperm.xlu0 %512, %v499
        %v514 = vpop.permute.xlu0 %513
        %v516 = vsub.f32 %v434, %v509
        %v517 = vsub.f32 %v480, %v514
        %v518 = vmul.f32 %v516, 1.442695
        %v519 = vpow.pop %v518
        %v520 = vmul.f32 %v517, 1.442695
        %v521 = vpow.pop %v520
        %v522 = vld [vmem:[#allocation3] sm:$0xff]
        %v523 = vld [vmem:[#allocation3 + $0x8] sm:$0xff]
        %v524 = vmul.f32 %v503, %v522
        %v525 = vmul.f32 %v505, %v523
        %v526 = vsel %vm487, %v519, 0.0
        %527 = vadd.xlane.f32.xlu0 %v526
        %v528 = vpop.xlane.xlu0 %527
        %v529 = vsel %vm487, %v521, 0.0
        %530 = vadd.xlane.f32.xlu0 %v529
        %v531 = vpop.xlane.xlu0 %530
        %v532 = vadd.f32 %v524, %v528
        %v533 = vadd.f32 %v525, %v531
        %vm534 = vcmask 7168
        %535 = vst.msk [vmem:[#allocation3] sm:$0xff] %vm534, %v532
        %536 = vst.msk [vmem:[#allocation3 + $0x8] sm:$0xff] %vm534, %v533
        %v537 = vld [vmem:[#allocation4] sm:$0xff]
        %v538 = vld [vmem:[#allocation4 + $0x8] sm:$0xff]
        %540 = vset.pattern.permute.xlu0 0
        %541 = vperm.xlu0 %540, %v503
        %v542 = vpop.permute.xlu0 %541
        %545 = vset.pattern.permute.xlu0 0
        %546 = vperm.xlu0 %545, %v505
        %v547 = vpop.permute.xlu0 %546
        %v549 = vmul.f32 %v542, %v537
        %v550 = vmul.f32 %v547, %v538
        %v551 = vpack.c.bf16 %v519, %v519
        %v552 = vpack.c.bf16 %v521, %v521
        %v554 = vsel %vm487, %v551, 0
        %vm556 = vcmask 1043456
        %v558 = vsel %vm556, %v386, 0
        %560 = vmatprep.subr.bf16.mxu0 0
        %561 = vmatpush1.bf16.msra.mxu0 0
        %562 = vmatprep.subr.bf16.mxu0 0
        %563 = vmatpush1.bf16.msra.mxu0 0
        %564 = vmatprep.subr.bf16.mxu0 0
        %565 = vmatpush1.bf16.msra.mxu0 0
        %566 = vmatprep.subr.bf16.mxu0 0
        %567 = vmatpush1.bf16.msra.mxu0 0
        %568 = vmatprep.subr.bf16.mxu0 0
        %569 = vmatpush1.bf16.msra.mxu0 0
        %570 = vmatprep.subr.bf16.mxu0 0
        %571 = vmatpush1.bf16.msra.mxu0 0
        %572 = vmatprep.subr.bf16.mxu0 0
        %573 = vmatpush1.bf16.msra.mxu0 0
        %574 = vmatprep.subr.bf16.mxu0 0
        %575 = vmatpush1.bf16.msra.mxu0 %v558
        %576 = vmatprep.subr.bf16.mxu0 0
        %577 = vmatpush2.bf16.msra.mxu0 0
        %578 = vmatprep.subr.bf16.mxu0 0
        %579 = vmatpush2.bf16.msra.mxu0 0
        %580 = vmatprep.subr.bf16.mxu0 0
        %581 = vmatpush2.bf16.msra.mxu0 0
        %582 = vmatprep.subr.bf16.mxu0 0
        %583 = vmatpush2.bf16.msra.mxu0 0
        %584 = vmatprep.subr.bf16.mxu0 0
        %585 = vmatpush2.bf16.msra.mxu0 0
        %586 = vmatprep.subr.bf16.mxu0 0
        %587 = vmatpush2.bf16.msra.mxu0 0
        %588 = vmatprep.subr.bf16.mxu0 0
        %589 = vmatpush2.bf16.msra.mxu0 0
        %590 = vmatprep.subr.bf16.mxu0 0
        %591 = vmatpush2.bf16.msra.mxu0 0
        %592 = vmatprep.mubr.bf16.mxu0 0
        %593 = vmatmul.mubr.bf16.gmra.mxu0 %v554
        %v594 = vpop.f32.mrf.mxu0
        %v595 = vadd.f32 0.0, %v594
        %v596 = vpop.f32.mrf.mxu0
        %v597 = vpop.f32.mrf.mxu0
        %v598 = vpop.f32.mrf.mxu0
        %599 = vdwg.mxu0
        %v601 = vsel %vm487, %v552, 0
        %v604 = vsel %vm556, %v387, 0
        %606 = vmatprep.subr.bf16.mxu0 0
        %607 = vmatpush1.bf16.msra.mxu0 0
        %608 = vmatprep.subr.bf16.mxu0 0
        %609 = vmatpush1.bf16.msra.mxu0 0
        %610 = vmatprep.subr.bf16.mxu0 0
        %611 = vmatpush1.bf16.msra.mxu0 0
        %612 = vmatprep.subr.bf16.mxu0 0
        %613 = vmatpush1.bf16.msra.mxu0 0
        %614 = vmatprep.subr.bf16.mxu0 0
        %615 = vmatpush1.bf16.msra.mxu0 0
        %616 = vmatprep.subr.bf16.mxu0 0
        %617 = vmatpush1.bf16.msra.mxu0 0
        %618 = vmatprep.subr.bf16.mxu0 0
        %619 = vmatpush1.bf16.msra.mxu0 0
        %620 = vmatprep.subr.bf16.mxu0 0
        %621 = vmatpush1.bf16.msra.mxu0 %v604
        %622 = vmatprep.subr.bf16.mxu0 0
        %623 = vmatpush2.bf16.msra.mxu0 0
        %624 = vmatprep.subr.bf16.mxu0 0
        %625 = vmatpush2.bf16.msra.mxu0 0
        %626 = vmatprep.subr.bf16.mxu0 0
        %627 = vmatpush2.bf16.msra.mxu0 0
        %628 = vmatprep.subr.bf16.mxu0 0
        %629 = vmatpush2.bf16.msra.mxu0 0
        %630 = vmatprep.subr.bf16.mxu0 0
        %631 = vmatpush2.bf16.msra.mxu0 0
        %632 = vmatprep.subr.bf16.mxu0 0
        %633 = vmatpush2.bf16.msra.mxu0 0
        %634 = vmatprep.subr.bf16.mxu0 0
        %635 = vmatpush2.bf16.msra.mxu0 0
        %636 = vmatprep.subr.bf16.mxu0 0
        %637 = vmatpush2.bf16.msra.mxu0 0
        %638 = vmatprep.mubr.bf16.mxu0 0
        %639 = vmatmul.mubr.bf16.gmra.mxu0 %v601
        %v640 = vpop.f32.mrf.mxu0
        %v641 = vadd.f32 0.0, %v640
        %v642 = vpop.f32.mrf.mxu0
        %v643 = vpop.f32.mrf.mxu0
        %v644 = vpop.f32.mrf.mxu0
        %645 = vdwg.mxu0
        %v646 = vadd.f32 %v549, %v595
        %v647 = vadd.f32 %v550, %v641
        %648 = vst.msk [vmem:[#allocation4] sm:$0xff] %vm392, %v646
        %649 = vst.msk [vmem:[#allocation4 + $0x8] sm:$0xff] %vm392, %v647
        %650 = vst.msk [vmem:[#allocation2] sm:$0xff] %vm534, %v494
        %651 = vst.msk [vmem:[#allocation2 + $0x8] sm:$0xff] %vm534, %v495
        // Predicated region
        $region57: #{tpu_custom_call.1} parent=35 // pred_check
          %p652 = pneg %p370
        $region58: #{tpu_custom_call.1} parent=35 // pred_check_branch
          %654 = sbr.rel (%p652) target = $region60
        $region59: #{tpu_custom_call.1} parent=35 // pred_region
          %v655 = vld [vmem:[#allocation3] sm:$0xff]
          %v656 = vld [vmem:[#allocation3 + $0x8] sm:$0xff]
          %vm657 = vcmp.gt.f32.partialorder %v655, 0.0
          %vm658 = vcmp.gt.f32.partialorder %v656, 0.0
          %v659 = vsel %vm657, %v655, 1.0
          %v660 = vsel %vm658, %v656, 1.0
          %v661 = vld [vmem:[#allocation4] sm:$0xff]
          %v662 = vld [vmem:[#allocation4 + $0x8] sm:$0xff]
          %v663 = vrcp.pop %v659
          %v664 = vrcp.pop %v660
          %666 = vset.pattern.permute.xlu0 0
          %667 = vperm.xlu0 %666, %v663
          %v668 = vpop.permute.xlu0 %667
          %671 = vset.pattern.permute.xlu0 0
          %672 = vperm.xlu0 %671, %v664
          %v673 = vpop.permute.xlu0 %672
          %v675 = vmul.f32 %v661, %v668
          %v676 = vmul.f32 %v662, %v673
          %v677 = vpack.c.bf16 %v675, %v675
          %v678 = vpack.c.bf16 %v676, %v676
          %vm679 = vcmask 125952
          %680 = vst.msk [vmem:[%s368] sm:$0xf] %vm679, %v677
          %681 = vst.msk [vmem:[%s368 + $0x4] sm:$0xf] %vm679, %v678
        $region60: #{tpu_custom_call.1} parent=35 // pred_fallthru
          _
        %s682 = sand.u32 %s170, 1
        %s683 = scalar_lea.sflag [#allocation7], %s682
        %s684 = sand.u32 %s170, 1
        %s685 = smul.addr %s684, 8
        %s686 = scalar_lea.vmem [#allocation13], %s685
        // Predicated region
        $region61: #{tpu_custom_call.1} parent=35 // pred_check
          %p687 = pneg %p180
        $region62: #{tpu_custom_call.1} parent=35 // pred_check_branch
          %689 = sbr.rel (%p687) target = $region64
        $region63: #{tpu_custom_call.1} parent=35 // pred_region
          %s691 = ssub.s32 128, 128
          %692 = vsyncadd %s683, %s691
          %s693 = smul.addr %s32, 2
          %s694 = sadd.s32 %s33, %s693
          %s695 = smul.addr %s694, 64
          %s696 = scalar_lea.hbm %s4, %s695
          %s697 = sshll.u32 %s686, 4
          %s698 = int_to_ptr.vmem [resolvable:$true] %s697
          %703 = dma.vmem_to_hbm [thread:$0]  %s698, 128, %s696, %s683, 64, 64, 4
        $region64: #{tpu_custom_call.1} parent=35 // pred_fallthru
          _
      $region36: #{tpu_custom_call.1} parent=5 // pred_fallthru
        _
      %p704 = scmp.le.s32.totalorder 2, %s22
      // Predicated region
      $region65: #{tpu_custom_call.1} parent=5 // pred_check
        %p705 = pneg %p704
      $region66: #{tpu_custom_call.1} parent=5 // pred_check_branch
        %707 = sbr.rel (%p705) target = $region68
      $region67: #{tpu_custom_call.1} parent=5 // pred_region
        %s708 = ssub.s32 %s22, 2
        // Predicated region
        $region69: #{tpu_custom_call.1} parent=67 // pred_check
          %p709 = pneg %p186
        $region70: #{tpu_custom_call.1} parent=67 // pred_check_branch
          %711 = sbr.rel (%p709) target = $region72
        $region71: #{tpu_custom_call.1} parent=67 // pred_region
          %s712 = sand.u32 %s171, 1
          %s713 = scalar_lea.sflag [#allocation7], %s712
          %s714 = sand.u32 %s171, 1
          %s715 = smul.addr %s714, 8
          %s716 = scalar_lea.vmem [#allocation13], %s715
          %717 = dma.done %s713, 128
        $region72: #{tpu_custom_call.1} parent=67 // pred_fallthru
          _
      $region68: #{tpu_custom_call.1} parent=5 // pred_fallthru
        _
    $region6: #{tpu_custom_call.1} parent=1 // loop_footer
      %s26 = sadd.s32 1, %s22
    $region7: #{tpu_custom_call.1} parent=1 // loop_footer_branch
      %21 = sbr.rel target = $region3
    $region8: #{tpu_custom_call.1} parent=1 // loop_exit
      _
    %718 = vsyncpa [#allocation6], 1
    %s719 = scalar_lea.sflag [#allocation6], 1
    %720 = vsyncpa %s719, 1
    %721 = vsyncpa [#allocation9], 1
    %s722 = scalar_lea.sflag [#allocation9], 1
    %723 = vsyncpa %s722, 1
    %724 = vsyncpa [#allocation12], 1
    %s725 = scalar_lea.sflag [#allocation12], 1
    %726 = vsyncpa %s725, 1
    %727 = vsyncpa [#allocation7], 1
    %s728 = scalar_lea.sflag [#allocation7], 1
    %729 = vsyncpa %s728, 1

</llo_original>
